<compile_context>
chip_gen: v5e
topology: v5e:2x2
jax: 0.10.0
libtpu: 0.0.40
codegen_flags: <defaults>
</compile_context>

<pallas_src>
import jax
import jax.numpy as jnp
from jax.experimental import pallas as pl
from jax.experimental.pallas import tpu as pltpu


def lstm_regressor_kernel(x_ref, wih_ref, whh_ref, bg_ref, wfc_ref, bfc_ref, out_ref):
    """Fused LSTM forward: input proj + recurrence + FC in one invocation.

    x_ref   : (B, T*2)   flattened inputs, lane-dense (step t at lanes [2t, 2t+2))
    wih_ref : (2, 4H)    W_ih^T, g-gate columns pre-scaled by 2
    whh_ref : (H, 4H)    W_hh^T, g-gate columns pre-scaled by 2
    bg_ref  : (1, 4H)    b_ih + b_hh, g-gate columns pre-scaled by 2
    wfc_ref : (1, H)     FC weight (row vector)
    bfc_ref : (1, 1)     FC bias
    out_ref : (B, T)     per-(batch, step) regression output
    """
    B = x_ref.shape[0]
    T = x_ref.shape[1] // 2
    Hh = whh_ref.shape[0]

    whh = whh_ref[...]                     # loaded once, reused every step
    wih0 = wih_ref[0:1, :]                 # (1, 4H)
    wih1 = wih_ref[1:2, :]                 # (1, 4H)
    bg = bg_ref[...]                       # (1, 4H)
    wfc = wfc_ref[...]                     # (1, H)
    bfc = bfc_ref[...]                     # (1, 1)

    # Input projection for every step, hoisted off the recurrence's serial path.
    # input_dim == 2  ->  two broadcast-FMAs (VPU) per step; results stay in vregs.
    xg = []
    for t in range(T):
        x0 = x_ref[:, 2 * t:2 * t + 1]     # (B, 1)
        x1 = x_ref[:, 2 * t + 1:2 * t + 2]
        xg.append(x0 * wih0 + x1 * wih1 + bg)          # (B, 4H)

    h = jnp.zeros((B, Hh), jnp.float32)
    c = jnp.zeros((B, Hh), jnp.float32)
    # Fully unrolled static loop: h/c live in vregs, all slices/stores are static.
    for t in range(T):
        # Only recurrence-dependent matmul on the serial path: (B,H) @ (H,4H).
        gates = xg[t] + jnp.dot(h, whh, preferred_element_type=jnp.float32)

        # Single full-vreg EUP pass; g recovered via tanh(x) = 2*sigmoid(2x) - 1
        # (the g-gate weight/bias columns were pre-scaled by 2).
        sg = jax.nn.sigmoid(gates)
        i = sg[:, 0 * Hh:1 * Hh]
        f = sg[:, 1 * Hh:2 * Hh]
        g = 2.0 * sg[:, 2 * Hh:3 * Hh] - 1.0
        o = sg[:, 3 * Hh:4 * Hh]

        c = f * c + i * g
        h = o * jnp.tanh(c)

        # FC (H -> 1): dead-end lane-reduce, overlapped with the recurrence.
        y = jnp.sum(h * wfc, axis=1, keepdims=True) + bfc          # (B, 1)
        out_ref[:, t:t + 1] = y


def lstm_regressor_forward(x, kparams):
    """x: (B, T, D, H, W) with D*H*W == 2, float32.  Returns (B, T, 1)."""
    wih_T, whh_T, b_gates, wfc_row, bfc = kparams
    B, T = x.shape[0], x.shape[1]
    Hh = whh_T.shape[0]
    x2d = x.reshape(B, T * 2).astype(jnp.float32)      # contiguous reshape (free in jit)

    out2d = pl.pallas_call(
        lstm_regressor_kernel,
        out_shape=jax.ShapeDtypeStruct((B, T), jnp.float32),
        grid_spec=pltpu.PrefetchScalarGridSpec(
            num_scalar_prefetch=0,
            grid=(1,),                                  # single invocation
            in_specs=[
                pl.BlockSpec((B, T * 2), lambda i: (0, 0)),     # inputs (lane-dense)
                pl.BlockSpec((2, 4 * Hh), lambda i: (0, 0)),    # W_ih^T (g-scaled)
                pl.BlockSpec((Hh, 4 * Hh), lambda i: (0, 0)),   # W_hh^T (g-scaled)
                pl.BlockSpec((1, 4 * Hh), lambda i: (0, 0)),    # fused bias
                pl.BlockSpec((1, Hh), lambda i: (0, 0)),        # FC weight row
                pl.BlockSpec((1, 1), lambda i: (0, 0)),         # FC bias
            ],
            out_specs=pl.BlockSpec((B, T), lambda i: (0, 0)),
        ),
        compiler_params=pltpu.CompilerParams(
            dimension_semantics=("arbitrary",)),
    )(x2d, wih_T, whh_T, b_gates, wfc_row, bfc)

    return out2d.reshape(B, T, 1)                       # trailing-1 reshape (free in jit)


def make_params(key, input_dim=2, hidden_dim=32):
    """Deterministic synthetic parameters in PyTorch nn.LSTM / nn.Linear layout."""
    k = jax.random.split(key, 6)
    s = 1.0 / jnp.sqrt(hidden_dim)
    w_ih = jax.random.uniform(k[0], (4 * hidden_dim, input_dim), jnp.float32, -s, s)
    w_hh = jax.random.uniform(k[1], (4 * hidden_dim, hidden_dim), jnp.float32, -s, s)
    b_ih = jax.random.uniform(k[2], (4 * hidden_dim,), jnp.float32, -s, s)
    b_hh = jax.random.uniform(k[3], (4 * hidden_dim,), jnp.float32, -s, s)
    w_fc = jax.random.uniform(k[4], (1, hidden_dim), jnp.float32, -s, s)
    b_fc = jax.random.uniform(k[5], (1,), jnp.float32, -s, s)
    return (w_ih, w_hh, b_ih, b_hh, w_fc, b_fc)


def prepare_kernel_params(params):
    """One-time weight prep: transpose, fuse biases, pre-scale g-gate columns by 2
    (so the kernel can use tanh(x) = 2*sigmoid(2x) - 1; scaling by 2 is fp-exact)."""
    w_ih, w_hh, b_ih, b_hh, w_fc, b_fc = params
    Hh = w_hh.shape[1]
    scale = jnp.ones((1, 4 * Hh), jnp.float32).at[:, 2 * Hh:3 * Hh].set(2.0)
    wih_T = jnp.asarray(w_ih.T, jnp.float32) * scale          # (2, 4H)
    whh_T = jnp.asarray(w_hh.T, jnp.float32) * scale          # (H, 4H)
    b_gates = (b_ih + b_hh).reshape(1, 4 * Hh).astype(jnp.float32) * scale
    wfc_row = jnp.asarray(w_fc, jnp.float32)                  # (1, H)
    bfc = jnp.asarray(b_fc.reshape(1, 1), jnp.float32)        # (1, 1)
    return (wih_T, whh_T, b_gates, wfc_row, bfc)


def lstm_regressor_ref(x, params):
    """Pure-JAX reference (PyTorch LSTM semantics, gate order i,f,g,o)."""
    w_ih, w_hh, b_ih, b_hh, w_fc, b_fc = params
    B, T = x.shape[0], x.shape[1]
    Hh = w_hh.shape[1]
    x_btd = x.reshape(B, T, 2).astype(jnp.float32)

    def step(carry, xt):
        h, c = carry
        gates = xt @ w_ih.T + h @ w_hh.T + b_ih + b_hh
        i = jax.nn.sigmoid(gates[:, 0 * Hh:1 * Hh])
        f = jax.nn.sigmoid(gates[:, 1 * Hh:2 * Hh])
        g = jnp.tanh(gates[:, 2 * Hh:3 * Hh])
        o = jax.nn.sigmoid(gates[:, 3 * Hh:4 * Hh])
        c = f * c + i * g
        h = o * jnp.tanh(c)
        return (h, c), h

    h0 = jnp.zeros((B, Hh), jnp.float32)
    c0 = jnp.zeros((B, Hh), jnp.float32)
    (_, _), hs = jax.lax.scan(step, (h0, c0), jnp.transpose(x_btd, (1, 0, 2)))
    out = hs @ w_fc.T + b_fc                             # (T, B, 1)
    return jnp.transpose(out, (1, 0, 2))                 # (B, T, 1)


if __name__ == "__main__":
    key = jax.random.PRNGKey(0)
    kx, kp = jax.random.split(key)

    B, T, D, H, W = 2, 8, 1, 1, 2        # D*H*W == 2, as required by x.view(B, T, 2)
    hidden_dim = 32                       # 4H = 128 lanes -> one vreg-wide gate tile

    x = jax.random.normal(kx, (B, T, D, H, W), dtype=jnp.float32)
    params = make_params(kp, input_dim=2, hidden_dim=hidden_dim)
    kparams = prepare_kernel_params(params)

    out = jax.jit(lstm_regressor_forward)(x, kparams)
    out = jax.block_until_ready(out)

    ref = jax.block_until_ready(lstm_regressor_ref(x, params))
    assert out.shape == (B, T, 1)
    # Slightly relaxed atol: the g gate uses tanh(x) = 2*sigmoid(2x) - 1, which differs
    # from jnp.tanh by a few ULPs of transcendental approximation.
    assert jnp.allclose(out, ref, atol=3e-5, rtol=1e-5), (
        f"max abs diff {jnp.max(jnp.abs(out - ref))}")

    print("KERNEL_OK")
</pallas_src>

<mosaic_0001>
module attributes {stable_mosaic.version = 11 : i64} {
  func.func @lstm_regressor_kernel(%arg0: i32, %arg1: memref<2x16xf32, #tpu.memory_space<vmem>>, %arg2: memref<2x128xf32, #tpu.memory_space<vmem>>, %arg3: memref<32x128xf32, #tpu.memory_space<vmem>>, %arg4: memref<1x128xf32, #tpu.memory_space<vmem>>, %arg5: memref<1x32xf32, #tpu.memory_space<vmem>>, %arg6: memref<1x1xf32, #tpu.memory_space<vmem>>, %arg7: memref<2x8xf32, #tpu.memory_space<vmem>>) attributes {dimension_semantics = [#tpu.dimension_semantics<arbitrary>], iteration_bounds = array<i64: 1>, scalar_prefetch = 0 : i64, scratch_operands = 0 : i64, tpu.core_type = #tpu.core_type<tc>, window_params = [{pipeline_mode = #tpu.pipeline_mode<synchronous>, transform_indices = @transform_0, window_bounds = array<i64: 2, 16>}, {pipeline_mode = #tpu.pipeline_mode<synchronous>, transform_indices = @transform_1, window_bounds = array<i64: 2, 128>}, {pipeline_mode = #tpu.pipeline_mode<synchronous>, transform_indices = @transform_2, window_bounds = array<i64: 32, 128>}, {pipeline_mode = #tpu.pipeline_mode<synchronous>, transform_indices = @transform_3, window_bounds = array<i64: 1, 128>}, {pipeline_mode = #tpu.pipeline_mode<synchronous>, transform_indices = @transform_4, window_bounds = array<i64: 1, 32>}, {pipeline_mode = #tpu.pipeline_mode<synchronous>, transform_indices = @transform_5, window_bounds = array<i64: 1, 1>}, {pipeline_mode = #tpu.pipeline_mode<synchronous>, transform_indices = @transform_6, window_bounds = array<i64: 2, 8>}]} {
    %c0 = arith.constant 0 : index
    %c0_0 = arith.constant 0 : index
    %0 = vector.load %arg3[%c0, %c0_0] : memref<32x128xf32, #tpu.memory_space<vmem>>, vector<32x128xf32>
    %c0_1 = arith.constant 0 : index
    %c0_2 = arith.constant 0 : index
    %1 = vector.load %arg2[%c0_1, %c0_2] : memref<2x128xf32, #tpu.memory_space<vmem>>, vector<1x128xf32>
    %c1 = arith.constant 1 : index
    %c0_3 = arith.constant 0 : index
    %2 = vector.load %arg2[%c1, %c0_3] : memref<2x128xf32, #tpu.memory_space<vmem>>, vector<1x128xf32>
    %c0_4 = arith.constant 0 : index
    %c0_5 = arith.constant 0 : index
    %3 = vector.load %arg4[%c0_4, %c0_5] : memref<1x128xf32, #tpu.memory_space<vmem>>, vector<1x128xf32>
    %c0_6 = arith.constant 0 : index
    %c0_7 = arith.constant 0 : index
    %4 = vector.load %arg5[%c0_6, %c0_7] : memref<1x32xf32, #tpu.memory_space<vmem>>, vector<1x32xf32>
    %c0_8 = arith.constant 0 : index
    %c0_9 = arith.constant 0 : index
    %5 = vector.load %arg6[%c0_8, %c0_9] : memref<1x1xf32, #tpu.memory_space<vmem>>, vector<1x1xf32>
    %c0_10 = arith.constant 0 : index
    %c0_11 = arith.constant 0 : index
    %6 = vector.load %arg1[%c0_10, %c0_11] : memref<2x16xf32, #tpu.memory_space<vmem>>, vector<2x1xf32>
    %c0_12 = arith.constant 0 : index
    %c1_13 = arith.constant 1 : index
    %7 = vector.load %arg1[%c0_12, %c1_13] : memref<2x16xf32, #tpu.memory_space<vmem>>, vector<2x1xf32>
    %8 = vector.broadcast %6 : vector<2x1xf32> to vector<2x128xf32>
    %9 = vector.broadcast %1 : vector<1x128xf32> to vector<2x128xf32>
    %10 = arith.mulf %8, %9 : vector<2x128xf32>
    %11 = vector.broadcast %7 : vector<2x1xf32> to vector<2x128xf32>
    %12 = vector.broadcast %2 : vector<1x128xf32> to vector<2x128xf32>
    %13 = arith.mulf %11, %12 : vector<2x128xf32>
    %14 = arith.addf %10, %13 : vector<2x128xf32>
    %15 = vector.broadcast %3 : vector<1x128xf32> to vector<2x128xf32>
    %16 = arith.addf %14, %15 : vector<2x128xf32>
    %c0_14 = arith.constant 0 : index
    %c2 = arith.constant 2 : index
    %17 = vector.load %arg1[%c0_14, %c2] : memref<2x16xf32, #tpu.memory_space<vmem>>, vector<2x1xf32>
    %c0_15 = arith.constant 0 : index
    %c3 = arith.constant 3 : index
    %18 = vector.load %arg1[%c0_15, %c3] : memref<2x16xf32, #tpu.memory_space<vmem>>, vector<2x1xf32>
    %19 = vector.broadcast %17 : vector<2x1xf32> to vector<2x128xf32>
    %20 = vector.broadcast %1 : vector<1x128xf32> to vector<2x128xf32>
    %21 = arith.mulf %19, %20 : vector<2x128xf32>
    %22 = vector.broadcast %18 : vector<2x1xf32> to vector<2x128xf32>
    %23 = vector.broadcast %2 : vector<1x128xf32> to vector<2x128xf32>
    %24 = arith.mulf %22, %23 : vector<2x128xf32>
    %25 = arith.addf %21, %24 : vector<2x128xf32>
    %26 = vector.broadcast %3 : vector<1x128xf32> to vector<2x128xf32>
    %27 = arith.addf %25, %26 : vector<2x128xf32>
    %c0_16 = arith.constant 0 : index
    %c4 = arith.constant 4 : index
    %28 = vector.load %arg1[%c0_16, %c4] : memref<2x16xf32, #tpu.memory_space<vmem>>, vector<2x1xf32>
    %c0_17 = arith.constant 0 : index
    %c5 = arith.constant 5 : index
    %29 = vector.load %arg1[%c0_17, %c5] : memref<2x16xf32, #tpu.memory_space<vmem>>, vector<2x1xf32>
    %30 = vector.broadcast %28 : vector<2x1xf32> to vector<2x128xf32>
    %31 = vector.broadcast %1 : vector<1x128xf32> to vector<2x128xf32>
    %32 = arith.mulf %30, %31 : vector<2x128xf32>
    %33 = vector.broadcast %29 : vector<2x1xf32> to vector<2x128xf32>
    %34 = vector.broadcast %2 : vector<1x128xf32> to vector<2x128xf32>
    %35 = arith.mulf %33, %34 : vector<2x128xf32>
    %36 = arith.addf %32, %35 : vector<2x128xf32>
    %37 = vector.broadcast %3 : vector<1x128xf32> to vector<2x128xf32>
    %38 = arith.addf %36, %37 : vector<2x128xf32>
    %c0_18 = arith.constant 0 : index
    %c6 = arith.constant 6 : index
    %39 = vector.load %arg1[%c0_18, %c6] : memref<2x16xf32, #tpu.memory_space<vmem>>, vector<2x1xf32>
    %c0_19 = arith.constant 0 : index
    %c7 = arith.constant 7 : index
    %40 = vector.load %arg1[%c0_19, %c7] : memref<2x16xf32, #tpu.memory_space<vmem>>, vector<2x1xf32>
    %41 = vector.broadcast %39 : vector<2x1xf32> to vector<2x128xf32>
    %42 = vector.broadcast %1 : vector<1x128xf32> to vector<2x128xf32>
    %43 = arith.mulf %41, %42 : vector<2x128xf32>
    %44 = vector.broadcast %40 : vector<2x1xf32> to vector<2x128xf32>
    %45 = vector.broadcast %2 : vector<1x128xf32> to vector<2x128xf32>
    %46 = arith.mulf %44, %45 : vector<2x128xf32>
    %47 = arith.addf %43, %46 : vector<2x128xf32>
    %48 = vector.broadcast %3 : vector<1x128xf32> to vector<2x128xf32>
    %49 = arith.addf %47, %48 : vector<2x128xf32>
    %c0_20 = arith.constant 0 : index
    %c8 = arith.constant 8 : index
    %50 = vector.load %arg1[%c0_20, %c8] : memref<2x16xf32, #tpu.memory_space<vmem>>, vector<2x1xf32>
    %c0_21 = arith.constant 0 : index
    %c9 = arith.constant 9 : index
    %51 = vector.load %arg1[%c0_21, %c9] : memref<2x16xf32, #tpu.memory_space<vmem>>, vector<2x1xf32>
    %52 = vector.broadcast %50 : vector<2x1xf32> to vector<2x128xf32>
    %53 = vector.broadcast %1 : vector<1x128xf32> to vector<2x128xf32>
    %54 = arith.mulf %52, %53 : vector<2x128xf32>
    %55 = vector.broadcast %51 : vector<2x1xf32> to vector<2x128xf32>
    %56 = vector.broadcast %2 : vector<1x128xf32> to vector<2x128xf32>
    %57 = arith.mulf %55, %56 : vector<2x128xf32>
    %58 = arith.addf %54, %57 : vector<2x128xf32>
    %59 = vector.broadcast %3 : vector<1x128xf32> to vector<2x128xf32>
    %60 = arith.addf %58, %59 : vector<2x128xf32>
    %c0_22 = arith.constant 0 : index
    %c10 = arith.constant 10 : index
    %61 = vector.load %arg1[%c0_22, %c10] : memref<2x16xf32, #tpu.memory_space<vmem>>, vector<2x1xf32>
    %c0_23 = arith.constant 0 : index
    %c11 = arith.constant 11 : index
    %62 = vector.load %arg1[%c0_23, %c11] : memref<2x16xf32, #tpu.memory_space<vmem>>, vector<2x1xf32>
    %63 = vector.broadcast %61 : vector<2x1xf32> to vector<2x128xf32>
    %64 = vector.broadcast %1 : vector<1x128xf32> to vector<2x128xf32>
    %65 = arith.mulf %63, %64 : vector<2x128xf32>
    %66 = vector.broadcast %62 : vector<2x1xf32> to vector<2x128xf32>
    %67 = vector.broadcast %2 : vector<1x128xf32> to vector<2x128xf32>
    %68 = arith.mulf %66, %67 : vector<2x128xf32>
    %69 = arith.addf %65, %68 : vector<2x128xf32>
    %70 = vector.broadcast %3 : vector<1x128xf32> to vector<2x128xf32>
    %71 = arith.addf %69, %70 : vector<2x128xf32>
    %c0_24 = arith.constant 0 : index
    %c12 = arith.constant 12 : index
    %72 = vector.load %arg1[%c0_24, %c12] : memref<2x16xf32, #tpu.memory_space<vmem>>, vector<2x1xf32>
    %c0_25 = arith.constant 0 : index
    %c13 = arith.constant 13 : index
    %73 = vector.load %arg1[%c0_25, %c13] : memref<2x16xf32, #tpu.memory_space<vmem>>, vector<2x1xf32>
    %74 = vector.broadcast %72 : vector<2x1xf32> to vector<2x128xf32>
    %75 = vector.broadcast %1 : vector<1x128xf32> to vector<2x128xf32>
    %76 = arith.mulf %74, %75 : vector<2x128xf32>
    %77 = vector.broadcast %73 : vector<2x1xf32> to vector<2x128xf32>
    %78 = vector.broadcast %2 : vector<1x128xf32> to vector<2x128xf32>
    %79 = arith.mulf %77, %78 : vector<2x128xf32>
    %80 = arith.addf %76, %79 : vector<2x128xf32>
    %81 = vector.broadcast %3 : vector<1x128xf32> to vector<2x128xf32>
    %82 = arith.addf %80, %81 : vector<2x128xf32>
    %c0_26 = arith.constant 0 : index
    %c14 = arith.constant 14 : index
    %83 = vector.load %arg1[%c0_26, %c14] : memref<2x16xf32, #tpu.memory_space<vmem>>, vector<2x1xf32>
    %c0_27 = arith.constant 0 : index
    %c15 = arith.constant 15 : index
    %84 = vector.load %arg1[%c0_27, %c15] : memref<2x16xf32, #tpu.memory_space<vmem>>, vector<2x1xf32>
    %85 = vector.broadcast %83 : vector<2x1xf32> to vector<2x128xf32>
    %86 = vector.broadcast %1 : vector<1x128xf32> to vector<2x128xf32>
    %87 = arith.mulf %85, %86 : vector<2x128xf32>
    %88 = vector.broadcast %84 : vector<2x1xf32> to vector<2x128xf32>
    %89 = vector.broadcast %2 : vector<1x128xf32> to vector<2x128xf32>
    %90 = arith.mulf %88, %89 : vector<2x128xf32>
    %91 = arith.addf %87, %90 : vector<2x128xf32>
    %92 = vector.broadcast %3 : vector<1x128xf32> to vector<2x128xf32>
    %93 = arith.addf %91, %92 : vector<2x128xf32>
    %cst = arith.constant 0.000000e+00 : f32
    %94 = vector.broadcast %cst : f32 to vector<2x32xf32>
    %cst_28 = arith.constant 0.000000e+00 : f32
    %95 = vector.broadcast %cst_28 : f32 to vector<2x32xf32>
    %cst_29 = arith.constant dense<0.000000e+00> : vector<2x128xf32>
    %96 = tpu.matmul %94, %0, %cst_29 {dimension_numbers = #tpu.dot_dimension_numbers<[1], [0], [0], [1], [0, 0, 1, 1], [], []>} : vector<2x32xf32>, vector<32x128xf32>, vector<2x128xf32> -> vector<2x128xf32>
    %97 = arith.addf %16, %96 : vector<2x128xf32>
    %98 = arith.negf %97 : vector<2x128xf32>
    %99 = math.exp %98 : vector<2x128xf32>
    %cst_30 = arith.constant 1.000000e+00 : f32
    %100 = vector.broadcast %cst_30 : f32 to vector<2x128xf32>
    %101 = arith.addf %100, %99 : vector<2x128xf32>
    %102 = arith.divf %100, %101 : vector<2x128xf32>
    %103 = vector.extract_strided_slice %102 {offsets = [0, 0], sizes = [2, 32], strides = [1, 1]} : vector<2x128xf32> to vector<2x32xf32>
    %104 = vector.extract_strided_slice %102 {offsets = [0, 32], sizes = [2, 32], strides = [1, 1]} : vector<2x128xf32> to vector<2x32xf32>
    %105 = vector.extract_strided_slice %102 {offsets = [0, 64], sizes = [2, 32], strides = [1, 1]} : vector<2x128xf32> to vector<2x32xf32>
    %cst_31 = arith.constant 2.000000e+00 : f32
    %106 = vector.broadcast %cst_31 : f32 to vector<2x32xf32>
    %107 = arith.mulf %106, %105 : vector<2x32xf32>
    %cst_32 = arith.constant 1.000000e+00 : f32
    %108 = vector.broadcast %cst_32 : f32 to vector<2x32xf32>
    %109 = arith.subf %107, %108 : vector<2x32xf32>
    %110 = vector.extract_strided_slice %102 {offsets = [0, 96], sizes = [2, 32], strides = [1, 1]} : vector<2x128xf32> to vector<2x32xf32>
    %111 = arith.mulf %104, %95 : vector<2x32xf32>
    %112 = arith.mulf %103, %109 : vector<2x32xf32>
    %113 = arith.addf %111, %112 : vector<2x32xf32>
    %114 = math.tanh %113 : vector<2x32xf32>
    %115 = arith.mulf %110, %114 : vector<2x32xf32>
    %116 = vector.broadcast %4 : vector<1x32xf32> to vector<2x32xf32>
    %117 = arith.mulf %115, %116 : vector<2x32xf32>
    %cst_33 = arith.constant dense<0.000000e+00> : vector<2xf32>
    %118 = vector.multi_reduction <add>, %117, %cst_33 [1] : vector<2x32xf32> to vector<2xf32>
    %119 = vector.shape_cast %118 : vector<2xf32> to vector<2x1xf32>
    %120 = vector.broadcast %5 : vector<1x1xf32> to vector<2x1xf32>
    %121 = arith.addf %119, %120 : vector<2x1xf32>
    %c0_34 = arith.constant 0 : index
    %c0_35 = arith.constant 0 : index
    %122 = vector.load %arg7[%c0_34, %c0_35] : memref<2x8xf32, #tpu.memory_space<vmem>>, vector<2x1xf32>
    tpu.vector_store %arg7[%c0_34, %c0_35], %121 {strides = array<i32>} : memref<2x8xf32, #tpu.memory_space<vmem>>, vector<2x1xf32>,
    %cst_36 = arith.constant dense<0.000000e+00> : vector<2x128xf32>
    %123 = tpu.matmul %115, %0, %cst_36 {dimension_numbers = #tpu.dot_dimension_numbers<[1], [0], [0], [1], [0, 0, 1, 1], [], []>} : vector<2x32xf32>, vector<32x128xf32>, vector<2x128xf32> -> vector<2x128xf32>
    %124 = arith.addf %27, %123 : vector<2x128xf32>
    %125 = arith.negf %124 : vector<2x128xf32>
    %126 = math.exp %125 : vector<2x128xf32>
    %cst_37 = arith.constant 1.000000e+00 : f32
    %127 = vector.broadcast %cst_37 : f32 to vector<2x128xf32>
    %128 = arith.addf %127, %126 : vector<2x128xf32>
    %129 = arith.divf %127, %128 : vector<2x128xf32>
    %130 = vector.extract_strided_slice %129 {offsets = [0, 0], sizes = [2, 32], strides = [1, 1]} : vector<2x128xf32> to vector<2x32xf32>
    %131 = vector.extract_strided_slice %129 {offsets = [0, 32], sizes = [2, 32], strides = [1, 1]} : vector<2x128xf32> to vector<2x32xf32>
    %132 = vector.extract_strided_slice %129 {offsets = [0, 64], sizes = [2, 32], strides = [1, 1]} : vector<2x128xf32> to vector<2x32xf32>
    %cst_38 = arith.constant 2.000000e+00 : f32
    %133 = vector.broadcast %cst_38 : f32 to vector<2x32xf32>
    %134 = arith.mulf %133, %132 : vector<2x32xf32>
    %cst_39 = arith.constant 1.000000e+00 : f32
    %135 = vector.broadcast %cst_39 : f32 to vector<2x32xf32>
    %136 = arith.subf %134, %135 : vector<2x32xf32>
    %137 = vector.extract_strided_slice %129 {offsets = [0, 96], sizes = [2, 32], strides = [1, 1]} : vector<2x128xf32> to vector<2x32xf32>
    %138 = arith.mulf %131, %113 : vector<2x32xf32>
    %139 = arith.mulf %130, %136 : vector<2x32xf32>
    %140 = arith.addf %138, %139 : vector<2x32xf32>
    %141 = math.tanh %140 : vector<2x32xf32>
    %142 = arith.mulf %137, %141 : vector<2x32xf32>
    %143 = vector.broadcast %4 : vector<1x32xf32> to vector<2x32xf32>
    %144 = arith.mulf %142, %143 : vector<2x32xf32>
    %cst_40 = arith.constant dense<0.000000e+00> : vector<2xf32>
    %145 = vector.multi_reduction <add>, %144, %cst_40 [1] : vector<2x32xf32> to vector<2xf32>
    %146 = vector.shape_cast %145 : vector<2xf32> to vector<2x1xf32>
    %147 = vector.broadcast %5 : vector<1x1xf32> to vector<2x1xf32>
    %148 = arith.addf %146, %147 : vector<2x1xf32>
    %c0_41 = arith.constant 0 : index
    %c1_42 = arith.constant 1 : index
    %149 = vector.load %arg7[%c0_41, %c1_42] : memref<2x8xf32, #tpu.memory_space<vmem>>, vector<2x1xf32>
    tpu.vector_store %arg7[%c0_41, %c1_42], %148 {strides = array<i32>} : memref<2x8xf32, #tpu.memory_space<vmem>>, vector<2x1xf32>,
    %cst_43 = arith.constant dense<0.000000e+00> : vector<2x128xf32>
    %150 = tpu.matmul %142, %0, %cst_43 {dimension_numbers = #tpu.dot_dimension_numbers<[1], [0], [0], [1], [0, 0, 1, 1], [], []>} : vector<2x32xf32>, vector<32x128xf32>, vector<2x128xf32> -> vector<2x128xf32>
    %151 = arith.addf %38, %150 : vector<2x128xf32>
    %152 = arith.negf %151 : vector<2x128xf32>
    %153 = math.exp %152 : vector<2x128xf32>
    %cst_44 = arith.constant 1.000000e+00 : f32
    %154 = vector.broadcast %cst_44 : f32 to vector<2x128xf32>
    %155 = arith.addf %154, %153 : vector<2x128xf32>
    %156 = arith.divf %154, %155 : vector<2x128xf32>
    %157 = vector.extract_strided_slice %156 {offsets = [0, 0], sizes = [2, 32], strides = [1, 1]} : vector<2x128xf32> to vector<2x32xf32>
    %158 = vector.extract_strided_slice %156 {offsets = [0, 32], sizes = [2, 32], strides = [1, 1]} : vector<2x128xf32> to vector<2x32xf32>
    %159 = vector.extract_strided_slice %156 {offsets = [0, 64], sizes = [2, 32], strides = [1, 1]} : vector<2x128xf32> to vector<2x32xf32>
    %cst_45 = arith.constant 2.000000e+00 : f32
    %160 = vector.broadcast %cst_45 : f32 to vector<2x32xf32>
    %161 = arith.mulf %160, %159 : vector<2x32xf32>
    %cst_46 = arith.constant 1.000000e+00 : f32
    %162 = vector.broadcast %cst_46 : f32 to vector<2x32xf32>
    %163 = arith.subf %161, %162 : vector<2x32xf32>
    %164 = vector.extract_strided_slice %156 {offsets = [0, 96], sizes = [2, 32], strides = [1, 1]} : vector<2x128xf32> to vector<2x32xf32>
    %165 = arith.mulf %158, %140 : vector<2x32xf32>
    %166 = arith.mulf %157, %163 : vector<2x32xf32>
    %167 = arith.addf %165, %166 : vector<2x32xf32>
    %168 = math.tanh %167 : vector<2x32xf32>
    %169 = arith.mulf %164, %168 : vector<2x32xf32>
    %170 = vector.broadcast %4 : vector<1x32xf32> to vector<2x32xf32>
    %171 = arith.mulf %169, %170 : vector<2x32xf32>
    %cst_47 = arith.constant dense<0.000000e+00> : vector<2xf32>
    %172 = vector.multi_reduction <add>, %171, %cst_47 [1] : vector<2x32xf32> to vector<2xf32>
    %173 = vector.shape_cast %172 : vector<2xf32> to vector<2x1xf32>
    %174 = vector.broadcast %5 : vector<1x1xf32> to vector<2x1xf32>
    %175 = arith.addf %173, %174 : vector<2x1xf32>
    %c0_48 = arith.constant 0 : index
    %c2_49 = arith.constant 2 : index
    %176 = vector.load %arg7[%c0_48, %c2_49] : memref<2x8xf32, #tpu.memory_space<vmem>>, vector<2x1xf32>
    tpu.vector_store %arg7[%c0_48, %c2_49], %175 {strides = array<i32>} : memref<2x8xf32, #tpu.memory_space<vmem>>, vector<2x1xf32>,
    %cst_50 = arith.constant dense<0.000000e+00> : vector<2x128xf32>
    %177 = tpu.matmul %169, %0, %cst_50 {dimension_numbers = #tpu.dot_dimension_numbers<[1], [0], [0], [1], [0, 0, 1, 1], [], []>} : vector<2x32xf32>, vector<32x128xf32>, vector<2x128xf32> -> vector<2x128xf32>
    %178 = arith.addf %49, %177 : vector<2x128xf32>
    %179 = arith.negf %178 : vector<2x128xf32>
    %180 = math.exp %179 : vector<2x128xf32>
    %cst_51 = arith.constant 1.000000e+00 : f32
    %181 = vector.broadcast %cst_51 : f32 to vector<2x128xf32>
    %182 = arith.addf %181, %180 : vector<2x128xf32>
    %183 = arith.divf %181, %182 : vector<2x128xf32>
    %184 = vector.extract_strided_slice %183 {offsets = [0, 0], sizes = [2, 32], strides = [1, 1]} : vector<2x128xf32> to vector<2x32xf32>
    %185 = vector.extract_strided_slice %183 {offsets = [0, 32], sizes = [2, 32], strides = [1, 1]} : vector<2x128xf32> to vector<2x32xf32>
    %186 = vector.extract_strided_slice %183 {offsets = [0, 64], sizes = [2, 32], strides = [1, 1]} : vector<2x128xf32> to vector<2x32xf32>
    %cst_52 = arith.constant 2.000000e+00 : f32
    %187 = vector.broadcast %cst_52 : f32 to vector<2x32xf32>
    %188 = arith.mulf %187, %186 : vector<2x32xf32>
    %cst_53 = arith.constant 1.000000e+00 : f32
    %189 = vector.broadcast %cst_53 : f32 to vector<2x32xf32>
    %190 = arith.subf %188, %189 : vector<2x32xf32>
    %191 = vector.extract_strided_slice %183 {offsets = [0, 96], sizes = [2, 32], strides = [1, 1]} : vector<2x128xf32> to vector<2x32xf32>
    %192 = arith.mulf %185, %167 : vector<2x32xf32>
    %193 = arith.mulf %184, %190 : vector<2x32xf32>
    %194 = arith.addf %192, %193 : vector<2x32xf32>
    %195 = math.tanh %194 : vector<2x32xf32>
    %196 = arith.mulf %191, %195 : vector<2x32xf32>
    %197 = vector.broadcast %4 : vector<1x32xf32> to vector<2x32xf32>
    %198 = arith.mulf %196, %197 : vector<2x32xf32>
    %cst_54 = arith.constant dense<0.000000e+00> : vector<2xf32>
    %199 = vector.multi_reduction <add>, %198, %cst_54 [1] : vector<2x32xf32> to vector<2xf32>
    %200 = vector.shape_cast %199 : vector<2xf32> to vector<2x1xf32>
    %201 = vector.broadcast %5 : vector<1x1xf32> to vector<2x1xf32>
    %202 = arith.addf %200, %201 : vector<2x1xf32>
    %c0_55 = arith.constant 0 : index
    %c3_56 = arith.constant 3 : index
    %203 = vector.load %arg7[%c0_55, %c3_56] : memref<2x8xf32, #tpu.memory_space<vmem>>, vector<2x1xf32>
    tpu.vector_store %arg7[%c0_55, %c3_56], %202 {strides = array<i32>} : memref<2x8xf32, #tpu.memory_space<vmem>>, vector<2x1xf32>,
    %cst_57 = arith.constant dense<0.000000e+00> : vector<2x128xf32>
    %204 = tpu.matmul %196, %0, %cst_57 {dimension_numbers = #tpu.dot_dimension_numbers<[1], [0], [0], [1], [0, 0, 1, 1], [], []>} : vector<2x32xf32>, vector<32x128xf32>, vector<2x128xf32> -> vector<2x128xf32>
    %205 = arith.addf %60, %204 : vector<2x128xf32>
    %206 = arith.negf %205 : vector<2x128xf32>
    %207 = math.exp %206 : vector<2x128xf32>
    %cst_58 = arith.constant 1.000000e+00 : f32
    %208 = vector.broadcast %cst_58 : f32 to vector<2x128xf32>
    %209 = arith.addf %208, %207 : vector<2x128xf32>
    %210 = arith.divf %208, %209 : vector<2x128xf32>
    %211 = vector.extract_strided_slice %210 {offsets = [0, 0], sizes = [2, 32], strides = [1, 1]} : vector<2x128xf32> to vector<2x32xf32>
    %212 = vector.extract_strided_slice %210 {offsets = [0, 32], sizes = [2, 32], strides = [1, 1]} : vector<2x128xf32> to vector<2x32xf32>
    %213 = vector.extract_strided_slice %210 {offsets = [0, 64], sizes = [2, 32], strides = [1, 1]} : vector<2x128xf32> to vector<2x32xf32>
    %cst_59 = arith.constant 2.000000e+00 : f32
    %214 = vector.broadcast %cst_59 : f32 to vector<2x32xf32>
    %215 = arith.mulf %214, %213 : vector<2x32xf32>
    %cst_60 = arith.constant 1.000000e+00 : f32
    %216 = vector.broadcast %cst_60 : f32 to vector<2x32xf32>
    %217 = arith.subf %215, %216 : vector<2x32xf32>
    %218 = vector.extract_strided_slice %210 {offsets = [0, 96], sizes = [2, 32], strides = [1, 1]} : vector<2x128xf32> to vector<2x32xf32>
    %219 = arith.mulf %212, %194 : vector<2x32xf32>
    %220 = arith.mulf %211, %217 : vector<2x32xf32>
    %221 = arith.addf %219, %220 : vector<2x32xf32>
    %222 = math.tanh %221 : vector<2x32xf32>
    %223 = arith.mulf %218, %222 : vector<2x32xf32>
    %224 = vector.broadcast %4 : vector<1x32xf32> to vector<2x32xf32>
    %225 = arith.mulf %223, %224 : vector<2x32xf32>
    %cst_61 = arith.constant dense<0.000000e+00> : vector<2xf32>
    %226 = vector.multi_reduction <add>, %225, %cst_61 [1] : vector<2x32xf32> to vector<2xf32>
    %227 = vector.shape_cast %226 : vector<2xf32> to vector<2x1xf32>
    %228 = vector.broadcast %5 : vector<1x1xf32> to vector<2x1xf32>
    %229 = arith.addf %227, %228 : vector<2x1xf32>
    %c0_62 = arith.constant 0 : index
    %c4_63 = arith.constant 4 : index
    %230 = vector.load %arg7[%c0_62, %c4_63] : memref<2x8xf32, #tpu.memory_space<vmem>>, vector<2x1xf32>
    tpu.vector_store %arg7[%c0_62, %c4_63], %229 {strides = array<i32>} : memref<2x8xf32, #tpu.memory_space<vmem>>, vector<2x1xf32>,
    %cst_64 = arith.constant dense<0.000000e+00> : vector<2x128xf32>
    %231 = tpu.matmul %223, %0, %cst_64 {dimension_numbers = #tpu.dot_dimension_numbers<[1], [0], [0], [1], [0, 0, 1, 1], [], []>} : vector<2x32xf32>, vector<32x128xf32>, vector<2x128xf32> -> vector<2x128xf32>
    %232 = arith.addf %71, %231 : vector<2x128xf32>
    %233 = arith.negf %232 : vector<2x128xf32>
    %234 = math.exp %233 : vector<2x128xf32>
    %cst_65 = arith.constant 1.000000e+00 : f32
    %235 = vector.broadcast %cst_65 : f32 to vector<2x128xf32>
    %236 = arith.addf %235, %234 : vector<2x128xf32>
    %237 = arith.divf %235, %236 : vector<2x128xf32>
    %238 = vector.extract_strided_slice %237 {offsets = [0, 0], sizes = [2, 32], strides = [1, 1]} : vector<2x128xf32> to vector<2x32xf32>
    %239 = vector.extract_strided_slice %237 {offsets = [0, 32], sizes = [2, 32], strides = [1, 1]} : vector<2x128xf32> to vector<2x32xf32>
    %240 = vector.extract_strided_slice %237 {offsets = [0, 64], sizes = [2, 32], strides = [1, 1]} : vector<2x128xf32> to vector<2x32xf32>
    %cst_66 = arith.constant 2.000000e+00 : f32
    %241 = vector.broadcast %cst_66 : f32 to vector<2x32xf32>
    %242 = arith.mulf %241, %240 : vector<2x32xf32>
    %cst_67 = arith.constant 1.000000e+00 : f32
    %243 = vector.broadcast %cst_67 : f32 to vector<2x32xf32>
    %244 = arith.subf %242, %243 : vector<2x32xf32>
    %245 = vector.extract_strided_slice %237 {offsets = [0, 96], sizes = [2, 32], strides = [1, 1]} : vector<2x128xf32> to vector<2x32xf32>
    %246 = arith.mulf %239, %221 : vector<2x32xf32>
    %247 = arith.mulf %238, %244 : vector<2x32xf32>
    %248 = arith.addf %246, %247 : vector<2x32xf32>
    %249 = math.tanh %248 : vector<2x32xf32>
    %250 = arith.mulf %245, %249 : vector<2x32xf32>
    %251 = vector.broadcast %4 : vector<1x32xf32> to vector<2x32xf32>
    %252 = arith.mulf %250, %251 : vector<2x32xf32>
    %cst_68 = arith.constant dense<0.000000e+00> : vector<2xf32>
    %253 = vector.multi_reduction <add>, %252, %cst_68 [1] : vector<2x32xf32> to vector<2xf32>
    %254 = vector.shape_cast %253 : vector<2xf32> to vector<2x1xf32>
    %255 = vector.broadcast %5 : vector<1x1xf32> to vector<2x1xf32>
    %256 = arith.addf %254, %255 : vector<2x1xf32>
    %c0_69 = arith.constant 0 : index
    %c5_70 = arith.constant 5 : index
    %257 = vector.load %arg7[%c0_69, %c5_70] : memref<2x8xf32, #tpu.memory_space<vmem>>, vector<2x1xf32>
    tpu.vector_store %arg7[%c0_69, %c5_70], %256 {strides = array<i32>} : memref<2x8xf32, #tpu.memory_space<vmem>>, vector<2x1xf32>,
    %cst_71 = arith.constant dense<0.000000e+00> : vector<2x128xf32>
    %258 = tpu.matmul %250, %0, %cst_71 {dimension_numbers = #tpu.dot_dimension_numbers<[1], [0], [0], [1], [0, 0, 1, 1], [], []>} : vector<2x32xf32>, vector<32x128xf32>, vector<2x128xf32> -> vector<2x128xf32>
    %259 = arith.addf %82, %258 : vector<2x128xf32>
    %260 = arith.negf %259 : vector<2x128xf32>
    %261 = math.exp %260 : vector<2x128xf32>
    %cst_72 = arith.constant 1.000000e+00 : f32
    %262 = vector.broadcast %cst_72 : f32 to vector<2x128xf32>
    %263 = arith.addf %262, %261 : vector<2x128xf32>
    %264 = arith.divf %262, %263 : vector<2x128xf32>
    %265 = vector.extract_strided_slice %264 {offsets = [0, 0], sizes = [2, 32], strides = [1, 1]} : vector<2x128xf32> to vector<2x32xf32>
    %266 = vector.extract_strided_slice %264 {offsets = [0, 32], sizes = [2, 32], strides = [1, 1]} : vector<2x128xf32> to vector<2x32xf32>
    %267 = vector.extract_strided_slice %264 {offsets = [0, 64], sizes = [2, 32], strides = [1, 1]} : vector<2x128xf32> to vector<2x32xf32>
    %cst_73 = arith.constant 2.000000e+00 : f32
    %268 = vector.broadcast %cst_73 : f32 to vector<2x32xf32>
    %269 = arith.mulf %268, %267 : vector<2x32xf32>
    %cst_74 = arith.constant 1.000000e+00 : f32
    %270 = vector.broadcast %cst_74 : f32 to vector<2x32xf32>
    %271 = arith.subf %269, %270 : vector<2x32xf32>
    %272 = vector.extract_strided_slice %264 {offsets = [0, 96], sizes = [2, 32], strides = [1, 1]} : vector<2x128xf32> to vector<2x32xf32>
    %273 = arith.mulf %266, %248 : vector<2x32xf32>
    %274 = arith.mulf %265, %271 : vector<2x32xf32>
    %275 = arith.addf %273, %274 : vector<2x32xf32>
    %276 = math.tanh %275 : vector<2x32xf32>
    %277 = arith.mulf %272, %276 : vector<2x32xf32>
    %278 = vector.broadcast %4 : vector<1x32xf32> to vector<2x32xf32>
    %279 = arith.mulf %277, %278 : vector<2x32xf32>
    %cst_75 = arith.constant dense<0.000000e+00> : vector<2xf32>
    %280 = vector.multi_reduction <add>, %279, %cst_75 [1] : vector<2x32xf32> to vector<2xf32>
    %281 = vector.shape_cast %280 : vector<2xf32> to vector<2x1xf32>
    %282 = vector.broadcast %5 : vector<1x1xf32> to vector<2x1xf32>
    %283 = arith.addf %281, %282 : vector<2x1xf32>
    %c0_76 = arith.constant 0 : index
    %c6_77 = arith.constant 6 : index
    %284 = vector.load %arg7[%c0_76, %c6_77] : memref<2x8xf32, #tpu.memory_space<vmem>>, vector<2x1xf32>
    tpu.vector_store %arg7[%c0_76, %c6_77], %283 {strides = array<i32>} : memref<2x8xf32, #tpu.memory_space<vmem>>, vector<2x1xf32>,
    %cst_78 = arith.constant dense<0.000000e+00> : vector<2x128xf32>
    %285 = tpu.matmul %277, %0, %cst_78 {dimension_numbers = #tpu.dot_dimension_numbers<[1], [0], [0], [1], [0, 0, 1, 1], [], []>} : vector<2x32xf32>, vector<32x128xf32>, vector<2x128xf32> -> vector<2x128xf32>
    %286 = arith.addf %93, %285 : vector<2x128xf32>
    %287 = arith.negf %286 : vector<2x128xf32>
    %288 = math.exp %287 : vector<2x128xf32>
    %cst_79 = arith.constant 1.000000e+00 : f32
    %289 = vector.broadcast %cst_79 : f32 to vector<2x128xf32>
    %290 = arith.addf %289, %288 : vector<2x128xf32>
    %291 = arith.divf %289, %290 : vector<2x128xf32>
    %292 = vector.extract_strided_slice %291 {offsets = [0, 0], sizes = [2, 32], strides = [1, 1]} : vector<2x128xf32> to vector<2x32xf32>
    %293 = vector.extract_strided_slice %291 {offsets = [0, 32], sizes = [2, 32], strides = [1, 1]} : vector<2x128xf32> to vector<2x32xf32>
    %294 = vector.extract_strided_slice %291 {offsets = [0, 64], sizes = [2, 32], strides = [1, 1]} : vector<2x128xf32> to vector<2x32xf32>
    %cst_80 = arith.constant 2.000000e+00 : f32
    %295 = vector.broadcast %cst_80 : f32 to vector<2x32xf32>
    %296 = arith.mulf %295, %294 : vector<2x32xf32>
    %cst_81 = arith.constant 1.000000e+00 : f32
    %297 = vector.broadcast %cst_81 : f32 to vector<2x32xf32>
    %298 = arith.subf %296, %297 : vector<2x32xf32>
    %299 = vector.extract_strided_slice %291 {offsets = [0, 96], sizes = [2, 32], strides = [1, 1]} : vector<2x128xf32> to vector<2x32xf32>
    %300 = arith.mulf %293, %275 : vector<2x32xf32>
    %301 = arith.mulf %292, %298 : vector<2x32xf32>
    %302 = arith.addf %300, %301 : vector<2x32xf32>
    %303 = math.tanh %302 : vector<2x32xf32>
    %304 = arith.mulf %299, %303 : vector<2x32xf32>
    %305 = vector.broadcast %4 : vector<1x32xf32> to vector<2x32xf32>
    %306 = arith.mulf %304, %305 : vector<2x32xf32>
    %cst_82 = arith.constant dense<0.000000e+00> : vector<2xf32>
    %307 = vector.multi_reduction <add>, %306, %cst_82 [1] : vector<2x32xf32> to vector<2xf32>
    %308 = vector.shape_cast %307 : vector<2xf32> to vector<2x1xf32>
    %309 = vector.broadcast %5 : vector<1x1xf32> to vector<2x1xf32>
    %310 = arith.addf %308, %309 : vector<2x1xf32>
    %c0_83 = arith.constant 0 : index
    %c7_84 = arith.constant 7 : index
    %311 = vector.load %arg7[%c0_83, %c7_84] : memref<2x8xf32, #tpu.memory_space<vmem>>, vector<2x1xf32>
    tpu.vector_store %arg7[%c0_83, %c7_84], %310 {strides = array<i32>} : memref<2x8xf32, #tpu.memory_space<vmem>>, vector<2x1xf32>,
    return
  }
  func.func @transform_0(%arg0: i32) -> (i32, i32) {
    %c0_i32 = arith.constant 0 : i32
    %c0_i32_0 = arith.constant 0 : i32
    %c0_i32_1 = arith.constant 0 : i32
    return %c0_i32, %c0_i32_0 : i32, i32
  }
  func.func @transform_1(%arg0: i32) -> (i32, i32) {
    %c0_i32 = arith.constant 0 : i32
    %c0_i32_0 = arith.constant 0 : i32
    %c0_i32_1 = arith.constant 0 : i32
    return %c0_i32, %c0_i32_0 : i32, i32
  }
  func.func @transform_2(%arg0: i32) -> (i32, i32) {
    %c0_i32 = arith.constant 0 : i32
    %c0_i32_0 = arith.constant 0 : i32
    %c0_i32_1 = arith.constant 0 : i32
    return %c0_i32, %c0_i32_0 : i32, i32
  }
  func.func @transform_3(%arg0: i32) -> (i32, i32) {
    %c0_i32 = arith.constant 0 : i32
    %c0_i32_0 = arith.constant 0 : i32
    %c0_i32_1 = arith.constant 0 : i32
    return %c0_i32, %c0_i32_0 : i32, i32
  }
  func.func @transform_4(%arg0: i32) -> (i32, i32) {
    %c0_i32 = arith.constant 0 : i32
    %c0_i32_0 = arith.constant 0 : i32
    %c0_i32_1 = arith.constant 0 : i32
    return %c0_i32, %c0_i32_0 : i32, i32
  }
  func.func @transform_5(%arg0: i32) -> (i32, i32) {
    %c0_i32 = arith.constant 0 : i32
    %c0_i32_0 = arith.constant 0 : i32
    %c0_i32_1 = arith.constant 0 : i32
    return %c0_i32, %c0_i32_0 : i32, i32
  }
  func.func @transform_6(%arg0: i32) -> (i32, i32) {
    %c0_i32 = arith.constant 0 : i32
    %c0_i32_0 = arith.constant 0 : i32
    %c0_i32_1 = arith.constant 0 : i32
    return %c0_i32, %c0_i32_0 : i32, i32
  }
}

</mosaic_0001>

<llo_original>
// kernel: lstm_regressor_forward.1
$region0: #{lstm_regressor_forward.1}
  #allocation0 [shape = 'u32[]', space=smem, size = 0x4, offset = 0x4, fixed_abs, tag = 'smem constant byte address 0x4 - core index']
  #allocation1 [shape = 'u32[72,128]{1,0:T(1,128)}', space=vmem, size = 0x9000, scoped, tag = 'internal scratch']
  #allocation2 [shape = 'f32[1,1]{1,0:T(1,128)S(1)}', space=vmem, size = 0x200, scoped, tag = 'scoped memory for lstm_regressor_forward.1']
  %s0 = inlined_call_operand.vmem [shape: f32[2,16], index: 0, kind: input, shape index: {}]
  %s1 = inlined_call_operand.vmem [shape: f32[2,128], index: 1, kind: input, shape index: {}]
  %s2 = inlined_call_operand.vmem [shape: f32[32,128], index: 2, kind: input, shape index: {}]
  %s3 = inlined_call_operand.vmem [shape: f32[1,128], index: 3, kind: input, shape index: {}]
  %s4 = inlined_call_operand.vmem [shape: f32[1,32], index: 4, kind: input, shape index: {}]
  %s5 = inlined_call_operand.<no memory space> [shape: f32[1,1], index: 5, kind: input, shape index: {}]
  %s6 = inlined_call_operand.hbm [shape: f32[2,8], index: 6, kind: output, shape index: {}]
  %s7 = sld [smem:[#allocation0]]
  $region34: #{lstm_regressor_forward.1} parent=0
    _
  %s9 = ssub.s32 1, %s7
  %s10 = scalar_select 0, %s9, %s7
  %v11 = vstv %s5
  %12 = vst [vmem:[#allocation2] sm:$0x1] %v11
  $region1: #{lstm_regressor_forward.1} parent=0
    #allocation3 [shape = 'u8[1024]{0}', space=vmem, size = 0x400, scoped, tag = 'output window, operand 0, single buffered']
    #allocation4 [shape = 's32[1]{0}', space=sflag, size = 0x4, scoped, tag = 'scoped memory for lstm_regressor_forward.1']
    %13 = vsyncpa [#allocation4], 0
    // Predicated region
    $region2: #{lstm_regressor_forward.1} parent=1 // pred_check
      _
    $region3: #{lstm_regressor_forward.1} parent=1 // pred_check_branch
      %15 = sbr.rel (0) target = $region5
    $region4: #{lstm_regressor_forward.1} parent=1 // pred_region
      _
    $region5: #{lstm_regressor_forward.1} parent=1 // pred_fallthru
      _
    // Predicated region
    $region6: #{lstm_regressor_forward.1} parent=1 // pred_check
      _
    $region7: #{lstm_regressor_forward.1} parent=1 // pred_check_branch
      %17 = sbr.rel (0) target = $region9
    $region8: #{lstm_regressor_forward.1} parent=1 // pred_region
      _
    $region9: #{lstm_regressor_forward.1} parent=1 // pred_fallthru
      _
    // Predicated region
    $region10: #{lstm_regressor_forward.1} parent=1 // pred_check
      _
    $region11: #{lstm_regressor_forward.1} parent=1 // pred_check_branch
      %19 = sbr.rel (0) target = $region13
    $region12: #{lstm_regressor_forward.1} parent=1 // pred_region
      _
    $region13: #{lstm_regressor_forward.1} parent=1 // pred_fallthru
      _
    // Predicated region
    $region14: #{lstm_regressor_forward.1} parent=1 // pred_check
      _
    $region15: #{lstm_regressor_forward.1} parent=1 // pred_check_branch
      %21 = sbr.rel (0) target = $region17
    $region16: #{lstm_regressor_forward.1} parent=1 // pred_region
      _
    $region17: #{lstm_regressor_forward.1} parent=1 // pred_fallthru
      _
    // Predicated region
    $region18: #{lstm_regressor_forward.1} parent=1 // pred_check
      _
    $region19: #{lstm_regressor_forward.1} parent=1 // pred_check_branch
      %23 = sbr.rel (0) target = $region21
    $region20: #{lstm_regressor_forward.1} parent=1 // pred_region
      _
    $region21: #{lstm_regressor_forward.1} parent=1 // pred_fallthru
      _
    // Predicated region
    $region22: #{lstm_regressor_forward.1} parent=1 // pred_check
      _
    $region23: #{lstm_regressor_forward.1} parent=1 // pred_check_branch
      %25 = sbr.rel (0) target = $region25
    $region24: #{lstm_regressor_forward.1} parent=1 // pred_region
      _
    $region25: #{lstm_regressor_forward.1} parent=1 // pred_fallthru
      _
    %v26 = vld [vmem:[%s2] sm:$0xff]
    %v27 = vld [vmem:[%s2 + $0x8] sm:$0xff]
    %v28 = vld [vmem:[%s2 + $0x10] sm:$0xff]
    %v29 = vld [vmem:[%s2 + $0x18] sm:$0xff]
    %v30 = vld [vmem:[%s1] sm:$0x1]
    %v31 = vld [vmem:[%s1 + $0x1] sm:$0x1]
    %v32 = vld [vmem:[%s3] sm:$0x1]
    %v33 = vld [vmem:[%s4] sm:$0x1]
    %v34 = vld [vmem:[#allocation2] sm:$0x1]
    %v35 = vld [vmem:[%s0] sm:$0x3]
    %37 = vset.pattern.permute.xlu0 0
    %38 = vperm.xlu0 %37, %v35
    %v39 = vpop.permute.xlu0 %38
    %v41 = vperm.slane %v30, 0
    %v42 = vmul.f32 %v39, %v41
    %43 = vset.pattern.permute.xlu0 1
    %44 = vperm.xlu0 %43, %v35
    %v45 = vpop.permute.xlu0 %44
    %v47 = vperm.slane %v31, 0
    %v48 = vmul.f32 %v45, %v47
    %v49 = vadd.f32 %v42, %v48
    %v51 = vperm.slane %v32, 0
    %v53 = vadd.f32 %v49, %v51
    %54 = vset.pattern.permute.xlu0 2
    %55 = vperm.xlu0 %54, %v35
    %v56 = vpop.permute.xlu0 %55
    %v58 = vmul.f32 %v56, %v41
    %59 = vset.pattern.permute.xlu0 3
    %60 = vperm.xlu0 %59, %v35
    %v61 = vpop.permute.xlu0 %60
    %v63 = vmul.f32 %v61, %v47
    %v64 = vadd.f32 %v58, %v63
    %v65 = vadd.f32 %v64, %v51
    %66 = vset.pattern.permute.xlu0 4
    %67 = vperm.xlu0 %66, %v35
    %v68 = vpop.permute.xlu0 %67
    %v70 = vmul.f32 %v68, %v41
    %71 = vset.pattern.permute.xlu0 5
    %72 = vperm.xlu0 %71, %v35
    %v73 = vpop.permute.xlu0 %72
    %v75 = vmul.f32 %v73, %v47
    %v76 = vadd.f32 %v70, %v75
    %v77 = vadd.f32 %v76, %v51
    %78 = vset.pattern.permute.xlu0 6
    %79 = vperm.xlu0 %78, %v35
    %v80 = vpop.permute.xlu0 %79
    %v82 = vmul.f32 %v80, %v41
    %83 = vset.pattern.permute.xlu0 7
    %84 = vperm.xlu0 %83, %v35
    %v85 = vpop.permute.xlu0 %84
    %v87 = vmul.f32 %v85, %v47
    %v88 = vadd.f32 %v82, %v87
    %v89 = vadd.f32 %v88, %v51
    %90 = vset.pattern.permute.xlu0 8
    %91 = vperm.xlu0 %90, %v35
    %v92 = vpop.permute.xlu0 %91
    %v94 = vmul.f32 %v92, %v41
    %95 = vset.pattern.permute.xlu0 9
    %96 = vperm.xlu0 %95, %v35
    %v97 = vpop.permute.xlu0 %96
    %v99 = vmul.f32 %v97, %v47
    %v100 = vadd.f32 %v94, %v99
    %v101 = vadd.f32 %v100, %v51
    %102 = vset.pattern.permute.xlu0 10
    %103 = vperm.xlu0 %102, %v35
    %v104 = vpop.permute.xlu0 %103
    %v106 = vmul.f32 %v104, %v41
    %107 = vset.pattern.permute.xlu0 11
    %108 = vperm.xlu0 %107, %v35
    %v109 = vpop.permute.xlu0 %108
    %v111 = vmul.f32 %v109, %v47
    %v112 = vadd.f32 %v106, %v111
    %v113 = vadd.f32 %v112, %v51
    %114 = vset.pattern.permute.xlu0 12
    %115 = vperm.xlu0 %114, %v35
    %v116 = vpop.permute.xlu0 %115
    %v118 = vmul.f32 %v116, %v41
    %119 = vset.pattern.permute.xlu0 13
    %120 = vperm.xlu0 %119, %v35
    %v121 = vpop.permute.xlu0 %120
    %v123 = vmul.f32 %v121, %v47
    %v124 = vadd.f32 %v118, %v123
    %v125 = vadd.f32 %v124, %v51
    %126 = vset.pattern.permute.xlu0 14
    %127 = vperm.xlu0 %126, %v35
    %v128 = vpop.permute.xlu0 %127
    %v130 = vmul.f32 %v128, %v41
    %131 = vset.pattern.permute.xlu0 15
    %132 = vperm.xlu0 %131, %v35
    %v133 = vpop.permute.xlu0 %132
    %v135 = vmul.f32 %v133, %v47
    %v136 = vadd.f32 %v130, %v135
    %v137 = vadd.f32 %v136, %v51
    %vm138 = vcmask 261120
    %v140 = vsel %vm138, 0.0, 0
    %142 = vmatpush.msra.mxu0 0.0
    %143 = vmatpush.msra.mxu0 0.0
    %144 = vmatpush.msra.mxu0 0.0
    %145 = vmatpush.msra.mxu0 0.0
    %146 = vmatpush.msra.mxu0 0.0
    %147 = vmatpush.msra.mxu0 0.0
    %148 = vmatpush.msra.mxu0 0.0
    %149 = vmatpush.msra.mxu0 0.0
    %150 = vmatpush.msra.mxu0 0.0
    %151 = vmatpush.msra.mxu0 0.0
    %152 = vmatpush.msra.mxu0 0.0
    %153 = vmatpush.msra.mxu0 0.0
    %154 = vmatpush.msra.mxu0 %v29
    %155 = vmatpush.msra.mxu0 %v28
    %156 = vmatpush.msra.mxu0 %v27
    %157 = vmatpush.msra.mxu0 %v26
    %158 = vmatmul.f32.gmra.mxu0 %v140
    %v159 = vpop.f32.mrf.mxu0
    %v160 = vadd.f32 0.0, %v159
    %161 = vdwg.mxu0
    %v162 = vadd.f32 %v53, %v160
    %v163 = vxor.u32 %v162, 2147483648
    %v164 = vmul.f32 %v163, 1.442695
    %v165 = vpow.pop %v164
    %v166 = vadd.f32 %v165, 1.0
    %v167 = vrcp.pop %v166
    %v168 = vmul.f32 %v166, %v167
    %v169 = vsub.f32 1.0, %v168
    %v170 = vmul.f32 %v167, %v169
    %v171 = vadd.f32 %v167, %v170
    %vm172 = vweird.f32 %v166
    %vm173 = vweird.f32 %v167
    %vm174 = vmor %vm172, %vm173
    %v175 = vsel %vm174, %v167, %v171
    %v176 = vand.u32 2147483647, %v166
    %vm177 = vcmp.eq.f32.partialorder %v176, 8.507059e+37
    %v178 = vand.u32 %v166, 2147483648
    %v179 = vor.u32 1.1754944e-38, %v178
    %v180 = vsel %vm177, %v179, %v175
    %v181 = vmul.f32 1.0, %v180
    %v182 = vmul.f32 %v181, 2.0
    %v183 = vsub.f32 %v182, 1.0
    %v184 = vmul.f32 %v181, 0.0
    %186 = vrot.lane.b32.xlu0 %v183, 64
    %v187 = vpop.permute.xlu0 %186
    %v189 = vmul.f32 %v181, %v187
    %191 = vrot.lane.b32.xlu0 %v189, 32
    %v192 = vpop.permute.xlu0 %191
    %v194 = vadd.f32 %v184, %v192
    %v195 = vtanh.pop %v194
    %197 = vrot.lane.b32.xlu0 %v195, 64
    %v198 = vpop.permute.xlu0 %197
    %v200 = vmul.f32 %v181, %v198
    %v202 = vperm.slane %v33, 0
    %203 = vrot.lane.b32.xlu0 %v202, 96
    %v204 = vpop.permute.xlu0 %203
    %v206 = vmul.f32 %v200, %v204
    %208 = vrot.lane.b32.xlu0 %v206, 32
    %v209 = vpop.permute.xlu0 %208
    %vm211 = vcmask 254976
    %v212 = vsel %vm211, %v209, 0.0
    %213 = vadd.xlane.f32.xlu0 %v212
    %v214 = vpop.xlane.xlu0 %213
    %v216 = vperm.slane %v34, 0
    %v218 = vadd.f32 %v214, %v216
    %vm219 = vcmask 1024
    %220 = vst.msk [vmem:[#allocation3] sm:$0x3] %vm219, %v218
    %222 = vrot.lane.b32.xlu0 %v200, 32
    %v223 = vpop.permute.xlu0 %222
    %v224 = vsel %vm138, %v223, 0
    %226 = vmatpush.msra.mxu0 0.0
    %227 = vmatpush.msra.mxu0 0.0
    %228 = vmatpush.msra.mxu0 0.0
    %229 = vmatpush.msra.mxu0 0.0
    %230 = vmatpush.msra.mxu0 0.0
    %231 = vmatpush.msra.mxu0 0.0
    %232 = vmatpush.msra.mxu0 0.0
    %233 = vmatpush.msra.mxu0 0.0
    %234 = vmatpush.msra.mxu0 0.0
    %235 = vmatpush.msra.mxu0 0.0
    %236 = vmatpush.msra.mxu0 0.0
    %237 = vmatpush.msra.mxu0 0.0
    %238 = vmatpush.msra.mxu0 %v29
    %239 = vmatpush.msra.mxu0 %v28
    %240 = vmatpush.msra.mxu0 %v27
    %241 = vmatpush.msra.mxu0 %v26
    %242 = vmatmul.f32.gmra.mxu0 %v224
    %v243 = vpop.f32.mrf.mxu0
    %v244 = vadd.f32 0.0, %v243
    %245 = vdwg.mxu0
    %v246 = vadd.f32 %v65, %v244
    %v247 = vxor.u32 %v246, 2147483648
    %v248 = vmul.f32 %v247, 1.442695
    %v249 = vpow.pop %v248
    %v250 = vadd.f32 %v249, 1.0
    %v251 = vrcp.pop %v250
    %v252 = vmul.f32 %v250, %v251
    %v253 = vsub.f32 1.0, %v252
    %v254 = vmul.f32 %v251, %v253
    %v255 = vadd.f32 %v251, %v254
    %vm256 = vweird.f32 %v250
    %vm257 = vweird.f32 %v251
    %vm258 = vmor %vm256, %vm257
    %v259 = vsel %vm258, %v251, %v255
    %v260 = vand.u32 2147483647, %v250
    %vm261 = vcmp.eq.f32.partialorder %v260, 8.507059e+37
    %v262 = vand.u32 %v250, 2147483648
    %v263 = vor.u32 1.1754944e-38, %v262
    %v264 = vsel %vm261, %v263, %v259
    %v265 = vmul.f32 1.0, %v264
    %v266 = vmul.f32 %v265, 2.0
    %v267 = vsub.f32 %v266, 1.0
    %v268 = vmul.f32 %v265, %v194
    %270 = vrot.lane.b32.xlu0 %v267, 64
    %v271 = vpop.permute.xlu0 %270
    %v273 = vmul.f32 %v265, %v271
    %275 = vrot.lane.b32.xlu0 %v273, 32
    %v276 = vpop.permute.xlu0 %275
    %v278 = vadd.f32 %v268, %v276
    %v279 = vtanh.pop %v278
    %281 = vrot.lane.b32.xlu0 %v279, 64
    %v282 = vpop.permute.xlu0 %281
    %v284 = vmul.f32 %v265, %v282
    %v285 = vmul.f32 %v284, %v204
    %287 = vrot.lane.b32.xlu0 %v285, 32
    %v288 = vpop.permute.xlu0 %287
    %v290 = vsel %vm211, %v288, 0.0
    %291 = vadd.xlane.f32.xlu0 %v290
    %v292 = vpop.xlane.xlu0 %291
    %v293 = vadd.f32 %v292, %v216
    %295 = vrot.lane.b32.xlu0 %v293, 1
    %v296 = vpop.permute.xlu0 %295
    %vm298 = vcmask 9224
    %299 = vst.msk [vmem:[#allocation3] sm:$0x3] %vm298, %v296
    %301 = vrot.lane.b32.xlu0 %v284, 32
    %v302 = vpop.permute.xlu0 %301
    %v303 = vsel %vm138, %v302, 0
    %305 = vmatpush.msra.mxu0 0.0
    %306 = vmatpush.msra.mxu0 0.0
    %307 = vmatpush.msra.mxu0 0.0
    %308 = vmatpush.msra.mxu0 0.0
    %309 = vmatpush.msra.mxu0 0.0
    %310 = vmatpush.msra.mxu0 0.0
    %311 = vmatpush.msra.mxu0 0.0
    %312 = vmatpush.msra.mxu0 0.0
    %313 = vmatpush.msra.mxu0 0.0
    %314 = vmatpush.msra.mxu0 0.0
    %315 = vmatpush.msra.mxu0 0.0
    %316 = vmatpush.msra.mxu0 0.0
    %317 = vmatpush.msra.mxu0 %v29
    %318 = vmatpush.msra.mxu0 %v28
    %319 = vmatpush.msra.mxu0 %v27
    %320 = vmatpush.msra.mxu0 %v26
    %321 = vmatmul.f32.gmra.mxu0 %v303
    %v322 = vpop.f32.mrf.mxu0
    %v323 = vadd.f32 0.0, %v322
    %324 = vdwg.mxu0
    %v325 = vadd.f32 %v77, %v323
    %v326 = vxor.u32 %v325, 2147483648
    %v327 = vmul.f32 %v326, 1.442695
    %v328 = vpow.pop %v327
    %v329 = vadd.f32 %v328, 1.0
    %v330 = vrcp.pop %v329
    %v331 = vmul.f32 %v329, %v330
    %v332 = vsub.f32 1.0, %v331
    %v333 = vmul.f32 %v330, %v332
    %v334 = vadd.f32 %v330, %v333
    %vm335 = vweird.f32 %v329
    %vm336 = vweird.f32 %v330
    %vm337 = vmor %vm335, %vm336
    %v338 = vsel %vm337, %v330, %v334
    %v339 = vand.u32 2147483647, %v329
    %vm340 = vcmp.eq.f32.partialorder %v339, 8.507059e+37
    %v341 = vand.u32 %v329, 2147483648
    %v342 = vor.u32 1.1754944e-38, %v341
    %v343 = vsel %vm340, %v342, %v338
    %v344 = vmul.f32 1.0, %v343
    %v345 = vmul.f32 %v344, 2.0
    %v346 = vsub.f32 %v345, 1.0
    %v347 = vmul.f32 %v344, %v278
    %349 = vrot.lane.b32.xlu0 %v346, 64
    %v350 = vpop.permute.xlu0 %349
    %v352 = vmul.f32 %v344, %v350
    %354 = vrot.lane.b32.xlu0 %v352, 32
    %v355 = vpop.permute.xlu0 %354
    %v357 = vadd.f32 %v347, %v355
    %v358 = vtanh.pop %v357
    %360 = vrot.lane.b32.xlu0 %v358, 64
    %v361 = vpop.permute.xlu0 %360
    %v363 = vmul.f32 %v344, %v361
    %v364 = vmul.f32 %v363, %v204
    %366 = vrot.lane.b32.xlu0 %v364, 32
    %v367 = vpop.permute.xlu0 %366
    %v369 = vsel %vm211, %v367, 0.0
    %370 = vadd.xlane.f32.xlu0 %v369
    %v371 = vpop.xlane.xlu0 %370
    %v372 = vadd.f32 %v371, %v216
    %374 = vrot.lane.b32.xlu0 %v372, 2
    %v375 = vpop.permute.xlu0 %374
    %vm377 = vcmask 17424
    %378 = vst.msk [vmem:[#allocation3] sm:$0x3] %vm377, %v375
    %380 = vrot.lane.b32.xlu0 %v363, 32
    %v381 = vpop.permute.xlu0 %380
    %v382 = vsel %vm138, %v381, 0
    %384 = vmatpush.msra.mxu0 0.0
    %385 = vmatpush.msra.mxu0 0.0
    %386 = vmatpush.msra.mxu0 0.0
    %387 = vmatpush.msra.mxu0 0.0
    %388 = vmatpush.msra.mxu0 0.0
    %389 = vmatpush.msra.mxu0 0.0
    %390 = vmatpush.msra.mxu0 0.0
    %391 = vmatpush.msra.mxu0 0.0
    %392 = vmatpush.msra.mxu0 0.0
    %393 = vmatpush.msra.mxu0 0.0
    %394 = vmatpush.msra.mxu0 0.0
    %395 = vmatpush.msra.mxu0 0.0
    %396 = vmatpush.msra.mxu0 %v29
    %397 = vmatpush.msra.mxu0 %v28
    %398 = vmatpush.msra.mxu0 %v27
    %399 = vmatpush.msra.mxu0 %v26
    %400 = vmatmul.f32.gmra.mxu0 %v382
    %v401 = vpop.f32.mrf.mxu0
    %v402 = vadd.f32 0.0, %v401
    %403 = vdwg.mxu0
    %v404 = vadd.f32 %v89, %v402
    %v405 = vxor.u32 %v404, 2147483648
    %v406 = vmul.f32 %v405, 1.442695
    %v407 = vpow.pop %v406
    %v408 = vadd.f32 %v407, 1.0
    %v409 = vrcp.pop %v408
    %v410 = vmul.f32 %v408, %v409
    %v411 = vsub.f32 1.0, %v410
    %v412 = vmul.f32 %v409, %v411
    %v413 = vadd.f32 %v409, %v412
    %vm414 = vweird.f32 %v408
    %vm415 = vweird.f32 %v409
    %vm416 = vmor %vm414, %vm415
    %v417 = vsel %vm416, %v409, %v413
    %v418 = vand.u32 2147483647, %v408
    %vm419 = vcmp.eq.f32.partialorder %v418, 8.507059e+37
    %v420 = vand.u32 %v408, 2147483648
    %v421 = vor.u32 1.1754944e-38, %v420
    %v422 = vsel %vm419, %v421, %v417
    %v423 = vmul.f32 1.0, %v422
    %v424 = vmul.f32 %v423, 2.0
    %v425 = vsub.f32 %v424, 1.0
    %v426 = vmul.f32 %v423, %v357
    %428 = vrot.lane.b32.xlu0 %v425, 64
    %v429 = vpop.permute.xlu0 %428
    %v431 = vmul.f32 %v423, %v429
    %433 = vrot.lane.b32.xlu0 %v431, 32
    %v434 = vpop.permute.xlu0 %433
    %v436 = vadd.f32 %v426, %v434
    %v437 = vtanh.pop %v436
    %439 = vrot.lane.b32.xlu0 %v437, 64
    %v440 = vpop.permute.xlu0 %439
    %v442 = vmul.f32 %v423, %v440
    %v443 = vmul.f32 %v442, %v204
    %445 = vrot.lane.b32.xlu0 %v443, 32
    %v446 = vpop.permute.xlu0 %445
    %v448 = vsel %vm211, %v446, 0.0
    %449 = vadd.xlane.f32.xlu0 %v448
    %v450 = vpop.xlane.xlu0 %449
    %v451 = vadd.f32 %v450, %v216
    %453 = vrot.lane.b32.xlu0 %v451, 3
    %v454 = vpop.permute.xlu0 %453
    %vm456 = vcmask 25624
    %457 = vst.msk [vmem:[#allocation3] sm:$0x3] %vm456, %v454
    %459 = vrot.lane.b32.xlu0 %v442, 32
    %v460 = vpop.permute.xlu0 %459
    %v461 = vsel %vm138, %v460, 0
    %463 = vmatpush.msra.mxu0 0.0
    %464 = vmatpush.msra.mxu0 0.0
    %465 = vmatpush.msra.mxu0 0.0
    %466 = vmatpush.msra.mxu0 0.0
    %467 = vmatpush.msra.mxu0 0.0
    %468 = vmatpush.msra.mxu0 0.0
    %469 = vmatpush.msra.mxu0 0.0
    %470 = vmatpush.msra.mxu0 0.0
    %471 = vmatpush.msra.mxu0 0.0
    %472 = vmatpush.msra.mxu0 0.0
    %473 = vmatpush.msra.mxu0 0.0
    %474 = vmatpush.msra.mxu0 0.0
    %475 = vmatpush.msra.mxu0 %v29
    %476 = vmatpush.msra.mxu0 %v28
    %477 = vmatpush.msra.mxu0 %v27
    %478 = vmatpush.msra.mxu0 %v26
    %479 = vmatmul.f32.gmra.mxu0 %v461
    %v480 = vpop.f32.mrf.mxu0
    %v481 = vadd.f32 0.0, %v480
    %482 = vdwg.mxu0
    %v483 = vadd.f32 %v101, %v481
    %v484 = vxor.u32 %v483, 2147483648
    %v485 = vmul.f32 %v484, 1.442695
    %v486 = vpow.pop %v485
    %v487 = vadd.f32 %v486, 1.0
    %v488 = vrcp.pop %v487
    %v489 = vmul.f32 %v487, %v488
    %v490 = vsub.f32 1.0, %v489
    %v491 = vmul.f32 %v488, %v490
    %v492 = vadd.f32 %v488, %v491
    %vm493 = vweird.f32 %v487
    %vm494 = vweird.f32 %v488
    %vm495 = vmor %vm493, %vm494
    %v496 = vsel %vm495, %v488, %v492
    %v497 = vand.u32 2147483647, %v487
    %vm498 = vcmp.eq.f32.partialorder %v497, 8.507059e+37
    %v499 = vand.u32 %v487, 2147483648
    %v500 = vor.u32 1.1754944e-38, %v499
    %v501 = vsel %vm498, %v500, %v496
    %v502 = vmul.f32 1.0, %v501
    %v503 = vmul.f32 %v502, 2.0
    %v504 = vsub.f32 %v503, 1.0
    %v505 = vmul.f32 %v502, %v436
    %507 = vrot.lane.b32.xlu0 %v504, 64
    %v508 = vpop.permute.xlu0 %507
    %v510 = vmul.f32 %v502, %v508
    %512 = vrot.lane.b32.xlu0 %v510, 32
    %v513 = vpop.permute.xlu0 %512
    %v515 = vadd.f32 %v505, %v513
    %v516 = vtanh.pop %v515
    %518 = vrot.lane.b32.xlu0 %v516, 64
    %v519 = vpop.permute.xlu0 %518
    %v521 = vmul.f32 %v502, %v519
    %v522 = vmul.f32 %v521, %v204
    %524 = vrot.lane.b32.xlu0 %v522, 32
    %v525 = vpop.permute.xlu0 %524
    %v527 = vsel %vm211, %v525, 0.0
    %528 = vadd.xlane.f32.xlu0 %v527
    %v529 = vpop.xlane.xlu0 %528
    %v530 = vadd.f32 %v529, %v216
    %532 = vrot.lane.b32.xlu0 %v530, 4
    %v533 = vpop.permute.xlu0 %532
    %vm535 = vcmask 33824
    %536 = vst.msk [vmem:[#allocation3] sm:$0x3] %vm535, %v533
    %538 = vrot.lane.b32.xlu0 %v521, 32
    %v539 = vpop.permute.xlu0 %538
    %v540 = vsel %vm138, %v539, 0
    %542 = vmatpush.msra.mxu0 0.0
    %543 = vmatpush.msra.mxu0 0.0
    %544 = vmatpush.msra.mxu0 0.0
    %545 = vmatpush.msra.mxu0 0.0
    %546 = vmatpush.msra.mxu0 0.0
    %547 = vmatpush.msra.mxu0 0.0
    %548 = vmatpush.msra.mxu0 0.0
    %549 = vmatpush.msra.mxu0 0.0
    %550 = vmatpush.msra.mxu0 0.0
    %551 = vmatpush.msra.mxu0 0.0
    %552 = vmatpush.msra.mxu0 0.0
    %553 = vmatpush.msra.mxu0 0.0
    %554 = vmatpush.msra.mxu0 %v29
    %555 = vmatpush.msra.mxu0 %v28
    %556 = vmatpush.msra.mxu0 %v27
    %557 = vmatpush.msra.mxu0 %v26
    %558 = vmatmul.f32.gmra.mxu0 %v540
    %v559 = vpop.f32.mrf.mxu0
    %v560 = vadd.f32 0.0, %v559
    %561 = vdwg.mxu0
    %v562 = vadd.f32 %v113, %v560
    %v563 = vxor.u32 %v562, 2147483648
    %v564 = vmul.f32 %v563, 1.442695
    %v565 = vpow.pop %v564
    %v566 = vadd.f32 %v565, 1.0
    %v567 = vrcp.pop %v566
    %v568 = vmul.f32 %v566, %v567
    %v569 = vsub.f32 1.0, %v568
    %v570 = vmul.f32 %v567, %v569
    %v571 = vadd.f32 %v567, %v570
    %vm572 = vweird.f32 %v566
    %vm573 = vweird.f32 %v567
    %vm574 = vmor %vm572, %vm573
    %v575 = vsel %vm574, %v567, %v571
    %v576 = vand.u32 2147483647, %v566
    %vm577 = vcmp.eq.f32.partialorder %v576, 8.507059e+37
    %v578 = vand.u32 %v566, 2147483648
    %v579 = vor.u32 1.1754944e-38, %v578
    %v580 = vsel %vm577, %v579, %v575
    %v581 = vmul.f32 1.0, %v580
    %v582 = vmul.f32 %v581, 2.0
    %v583 = vsub.f32 %v582, 1.0
    %v584 = vmul.f32 %v581, %v515
    %586 = vrot.lane.b32.xlu0 %v583, 64
    %v587 = vpop.permute.xlu0 %586
    %v589 = vmul.f32 %v581, %v587
    %591 = vrot.lane.b32.xlu0 %v589, 32
    %v592 = vpop.permute.xlu0 %591
    %v594 = vadd.f32 %v584, %v592
    %v595 = vtanh.pop %v594
    %597 = vrot.lane.b32.xlu0 %v595, 64
    %v598 = vpop.permute.xlu0 %597
    %v600 = vmul.f32 %v581, %v598
    %v601 = vmul.f32 %v600, %v204
    %603 = vrot.lane.b32.xlu0 %v601, 32
    %v604 = vpop.permute.xlu0 %603
    %v606 = vsel %vm211, %v604, 0.0
    %607 = vadd.xlane.f32.xlu0 %v606
    %v608 = vpop.xlane.xlu0 %607
    %v609 = vadd.f32 %v608, %v216
    %611 = vrot.lane.b32.xlu0 %v609, 5
    %v612 = vpop.permute.xlu0 %611
    %vm614 = vcmask 42024
    %615 = vst.msk [vmem:[#allocation3] sm:$0x3] %vm614, %v612
    %617 = vrot.lane.b32.xlu0 %v600, 32
    %v618 = vpop.permute.xlu0 %617
    %v619 = vsel %vm138, %v618, 0
    %621 = vmatpush.msra.mxu0 0.0
    %622 = vmatpush.msra.mxu0 0.0
    %623 = vmatpush.msra.mxu0 0.0
    %624 = vmatpush.msra.mxu0 0.0
    %625 = vmatpush.msra.mxu0 0.0
    %626 = vmatpush.msra.mxu0 0.0
    %627 = vmatpush.msra.mxu0 0.0
    %628 = vmatpush.msra.mxu0 0.0
    %629 = vmatpush.msra.mxu0 0.0
    %630 = vmatpush.msra.mxu0 0.0
    %631 = vmatpush.msra.mxu0 0.0
    %632 = vmatpush.msra.mxu0 0.0
    %633 = vmatpush.msra.mxu0 %v29
    %634 = vmatpush.msra.mxu0 %v28
    %635 = vmatpush.msra.mxu0 %v27
    %636 = vmatpush.msra.mxu0 %v26
    %637 = vmatmul.f32.gmra.mxu0 %v619
    %v638 = vpop.f32.mrf.mxu0
    %v639 = vadd.f32 0.0, %v638
    %640 = vdwg.mxu0
    %v641 = vadd.f32 %v125, %v639
    %v642 = vxor.u32 %v641, 2147483648
    %v643 = vmul.f32 %v642, 1.442695
    %v644 = vpow.pop %v643
    %v645 = vadd.f32 %v644, 1.0
    %v646 = vrcp.pop %v645
    %v647 = vmul.f32 %v645, %v646
    %v648 = vsub.f32 1.0, %v647
    %v649 = vmul.f32 %v646, %v648
    %v650 = vadd.f32 %v646, %v649
    %vm651 = vweird.f32 %v645
    %vm652 = vweird.f32 %v646
    %vm653 = vmor %vm651, %vm652
    %v654 = vsel %vm653, %v646, %v650
    %v655 = vand.u32 2147483647, %v645
    %vm656 = vcmp.eq.f32.partialorder %v655, 8.507059e+37
    %v657 = vand.u32 %v645, 2147483648
    %v658 = vor.u32 1.1754944e-38, %v657
    %v659 = vsel %vm656, %v658, %v654
    %v660 = vmul.f32 1.0, %v659
    %v661 = vmul.f32 %v660, 2.0
    %v662 = vsub.f32 %v661, 1.0
    %v663 = vmul.f32 %v660, %v594
    %665 = vrot.lane.b32.xlu0 %v662, 64
    %v666 = vpop.permute.xlu0 %665
    %v668 = vmul.f32 %v660, %v666
    %670 = vrot.lane.b32.xlu0 %v668, 32
    %v671 = vpop.permute.xlu0 %670
    %v673 = vadd.f32 %v663, %v671
    %v674 = vtanh.pop %v673
    %676 = vrot.lane.b32.xlu0 %v674, 64
    %v677 = vpop.permute.xlu0 %676
    %v679 = vmul.f32 %v660, %v677
    %v680 = vmul.f32 %v679, %v204
    %682 = vrot.lane.b32.xlu0 %v680, 32
    %v683 = vpop.permute.xlu0 %682
    %v685 = vsel %vm211, %v683, 0.0
    %686 = vadd.xlane.f32.xlu0 %v685
    %v687 = vpop.xlane.xlu0 %686
    %v688 = vadd.f32 %v687, %v216
    %690 = vrot.lane.b32.xlu0 %v688, 6
    %v691 = vpop.permute.xlu0 %690
    %vm693 = vcmask 50224
    %694 = vst.msk [vmem:[#allocation3] sm:$0x3] %vm693, %v691
    %696 = vrot.lane.b32.xlu0 %v679, 32
    %v697 = vpop.permute.xlu0 %696
    %v698 = vsel %vm138, %v697, 0
    %700 = vmatpush.msra.mxu0 0.0
    %701 = vmatpush.msra.mxu0 0.0
    %702 = vmatpush.msra.mxu0 0.0
    %703 = vmatpush.msra.mxu0 0.0
    %704 = vmatpush.msra.mxu0 0.0
    %705 = vmatpush.msra.mxu0 0.0
    %706 = vmatpush.msra.mxu0 0.0
    %707 = vmatpush.msra.mxu0 0.0
    %708 = vmatpush.msra.mxu0 0.0
    %709 = vmatpush.msra.mxu0 0.0
    %710 = vmatpush.msra.mxu0 0.0
    %711 = vmatpush.msra.mxu0 0.0
    %712 = vmatpush.msra.mxu0 %v29
    %713 = vmatpush.msra.mxu0 %v28
    %714 = vmatpush.msra.mxu0 %v27
    %715 = vmatpush.msra.mxu0 %v26
    %716 = vmatmul.f32.gmra.mxu0 %v698
    %v717 = vpop.f32.mrf.mxu0
    %v718 = vadd.f32 0.0, %v717
    %719 = vdwg.mxu0
    %v720 = vadd.f32 %v137, %v718
    %v721 = vxor.u32 %v720, 2147483648
    %v722 = vmul.f32 %v721, 1.442695
    %v723 = vpow.pop %v722
    %v724 = vadd.f32 %v723, 1.0
    %v725 = vrcp.pop %v724
    %v726 = vmul.f32 %v724, %v725
    %v727 = vsub.f32 1.0, %v726
    %v728 = vmul.f32 %v725, %v727
    %v729 = vadd.f32 %v725, %v728
    %vm730 = vweird.f32 %v724
    %vm731 = vweird.f32 %v725
    %vm732 = vmor %vm730, %vm731
    %v733 = vsel %vm732, %v725, %v729
    %v734 = vand.u32 2147483647, %v724
    %vm735 = vcmp.eq.f32.partialorder %v734, 8.507059e+37
    %v736 = vand.u32 %v724, 2147483648
    %v737 = vor.u32 1.1754944e-38, %v736
    %v738 = vsel %vm735, %v737, %v733
    %v739 = vmul.f32 1.0, %v738
    %v740 = vmul.f32 %v739, 2.0
    %v741 = vsub.f32 %v740, 1.0
    %v742 = vmul.f32 %v739, %v673
    %744 = vrot.lane.b32.xlu0 %v741, 64
    %v745 = vpop.permute.xlu0 %744
    %v747 = vmul.f32 %v739, %v745
    %749 = vrot.lane.b32.xlu0 %v747, 32
    %v750 = vpop.permute.xlu0 %749
    %v752 = vadd.f32 %v742, %v750
    %v753 = vtanh.pop %v752
    %755 = vrot.lane.b32.xlu0 %v753, 64
    %v756 = vpop.permute.xlu0 %755
    %v758 = vmul.f32 %v739, %v756
    %v759 = vmul.f32 %v758, %v204
    %761 = vrot.lane.b32.xlu0 %v759, 32
    %v762 = vpop.permute.xlu0 %761
    %v764 = vsel %vm211, %v762, 0.0
    %765 = vadd.xlane.f32.xlu0 %v764
    %v766 = vpop.xlane.xlu0 %765
    %v767 = vadd.f32 %v766, %v216
    %769 = vrot.lane.b32.xlu0 %v767, 7
    %v770 = vpop.permute.xlu0 %769
    %vm772 = vcmask 58424
    %773 = vst.msk [vmem:[#allocation3] sm:$0x3] %vm772, %v770
    // Predicated region
    $region26: #{lstm_regressor_forward.1} parent=1 // pred_check
      _
    $region27: #{lstm_regressor_forward.1} parent=1 // pred_check_branch
      %775 = sbr.rel (0) target = $region29
    $region28: #{lstm_regressor_forward.1} parent=1 // pred_region
      %777 = vsyncadd [#allocation4], 0
      %s779 = sshll.u32 [#allocation3], 4
      %s780 = int_to_ptr.vmem [resolvable:$true] %s779
      %s781 = sshll.u32 %s6, 4
      %s782 = int_to_ptr.hbm [resolvable:$true] %s781
      %784 = dma.vmem_to_hbm [thread:$0]  %s780, 32, %s782, [#allocation4]
    $region29: #{lstm_regressor_forward.1} parent=1 // pred_fallthru
      _
    // Predicated region
    $region30: #{lstm_regressor_forward.1} parent=1 // pred_check
      _
    $region31: #{lstm_regressor_forward.1} parent=1 // pred_check_branch
      %786 = sbr.rel (0) target = $region33
    $region32: #{lstm_regressor_forward.1} parent=1 // pred_region
      %788 = dma.done [#allocation4], 32
    $region33: #{lstm_regressor_forward.1} parent=1 // pred_fallthru
      _
    %789 = vsyncpa [#allocation4], 1

</llo_original>
